<compile_context>
chip_gen: v7x
topology: tpu7x:2x2x1
jax: 0.10.0
libtpu: 0.0.40
codegen_flags: <defaults>
</compile_context>

<pallas_src>
import jax
import jax.numpy as jnp
import numpy as np
from jax.experimental import pallas as pl
from jax.experimental.pallas import tpu as pltpu

LANE = 128
SUBLANE = 16  # bf16 sublane packing


def _round_up(x, m):
    return ((x + m - 1) // m) * m


# ----------------------------- Pallas kernel -------------------------------
def actor_kernel(s_ref, w1_ref, b1_ref, w2_ref, b2_ref, w3_ref, b3_ref, o_ref):
    # fc1 + ReLU   (bf16 x bf16 -> f32 accumulate on the MXU)
    h1 = jnp.dot(s_ref[...], w1_ref[...], preferred_element_type=jnp.float32)
    h1 = jnp.maximum(h1 + b1_ref[...], 0.0)                 # f32 elementwise
    # fc2 + ReLU
    h2 = jnp.dot(h1.astype(w2_ref.dtype), w2_ref[...],
                 preferred_element_type=jnp.float32)
    h2 = jnp.maximum(h2 + b2_ref[...], 0.0)
    # fc3 + tanh
    out = jnp.dot(h2.astype(w3_ref.dtype), w3_ref[...],
                  preferred_element_type=jnp.float32)
    o_ref[...] = jnp.tanh(out + b3_ref[...])


# ------------------------------- wrapper ------------------------------------
def actor_forward(states, params, tm=256):
    """states: [N, state_dim] float32.  Returns [N, action_dim] float32."""
    w1, b1 = params["w1"], params["b1"]
    w2, b2 = params["w2"], params["b2"]
    w3, b3 = params["w3"], params["b3"]
    state_dim = params["state_dim"]
    action_dim = params["action_dim"]

    sd_p, h1_p = w1.shape
    h2_p = w2.shape[1]
    ad_p = w3.shape[1]

    n = states.shape[0]
    # Rows per grid step: multiple of 16 (bf16 sublane packing), capped by N.
    tm_eff = _round_up(min(tm, _round_up(n, SUBLANE)), SUBLANE)
    n_p = _round_up(n, tm_eff)

    # Pad batch rows and state columns with zeros; cast matmul input to bf16.
    s = jnp.pad(states, ((0, n_p - n), (0, sd_p - state_dim))).astype(jnp.bfloat16)

    grid = (n_p // tm_eff,)

    out = pl.pallas_call(
        actor_kernel,
        out_shape=jax.ShapeDtypeStruct((n_p, ad_p), jnp.float32),
        grid_spec=pltpu.PrefetchScalarGridSpec(
            num_scalar_prefetch=0,
            grid=grid,
            in_specs=[
                # states: tiled over the batch grid axis.
                pl.BlockSpec((tm_eff, sd_p), lambda i: (i, 0)),
                # weights / biases: constant index -> fetched once, VMEM-resident.
                pl.BlockSpec((sd_p, h1_p), lambda i: (0, 0)),
                pl.BlockSpec((1, h1_p), lambda i: (0, 0)),
                pl.BlockSpec((h1_p, h2_p), lambda i: (0, 0)),
                pl.BlockSpec((1, h2_p), lambda i: (0, 0)),
                pl.BlockSpec((h2_p, ad_p), lambda i: (0, 0)),
                pl.BlockSpec((1, ad_p), lambda i: (0, 0)),
            ],
            out_specs=pl.BlockSpec((tm_eff, ad_p), lambda i: (i, 0)),
        ),
        compiler_params=pltpu.CompilerParams(
            dimension_semantics=("parallel",)),
    )(s, w1, b1, w2, b2, w3, b3)

    # Slice away batch padding and the lane-padded action columns.
    return out[:n, :action_dim]


# ----------------------- deterministic parameter init ----------------------
def fanin_init(key, size):
    """Mirror of the PyTorch fanin_init: U(-1/sqrt(size[0]), 1/sqrt(size[0]))."""
    v = 1.0 / np.sqrt(size[0])
    return jax.random.uniform(key, size, jnp.float32, minval=-v, maxval=v)


def init_actor_params(key, state_dim, action_dim, h1=400, h2=300):
    ks = jax.random.split(key, 6)
    # PyTorch weight shapes are (out, in); fanin_init uses size[0] = out.
    w1_t = fanin_init(ks[0], (h1, state_dim))          # fc1.weight
    b1 = fanin_init(ks[1], (h1,))                      # fc1.bias
    w2_t = fanin_init(ks[2], (h2, h1))                 # fc2.weight
    b2 = fanin_init(ks[3], (h2,))                      # fc2.bias
    w3_t = jax.random.uniform(ks[4], (action_dim, h2), jnp.float32,
                              minval=-0.003, maxval=0.003)
    b3 = jax.random.uniform(ks[5], (action_dim,), jnp.float32,
                            minval=-0.003, maxval=0.003)

    # Lane-aligned padded sizes.
    sd_p = _round_up(state_dim, LANE)
    h1_p = _round_up(h1, LANE)          # 400 -> 512
    h2_p = _round_up(h2, LANE)          # 300 -> 384
    ad_p = _round_up(action_dim, LANE)  # 8   -> 128

    def pad2(a, rows, cols):
        return jnp.pad(a, ((0, rows - a.shape[0]), (0, cols - a.shape[1])))

    return {
        # Weights stored [in, out], zero-padded, bf16 for the MXU.
        "w1": pad2(w1_t.T, sd_p, h1_p).astype(jnp.bfloat16),
        "b1": pad2(b1.reshape(1, -1), 1, h1_p),          # f32 bias
        "w2": pad2(w2_t.T, h1_p, h2_p).astype(jnp.bfloat16),
        "b2": pad2(b2.reshape(1, -1), 1, h2_p),
        "w3": pad2(w3_t.T, h2_p, ad_p).astype(jnp.bfloat16),
        "b3": pad2(b3.reshape(1, -1), 1, ad_p),
        "state_dim": state_dim,
        "action_dim": action_dim,
    }


# --------------------------------- main -------------------------------------
if __name__ == "__main__":
    key = jax.random.PRNGKey(0)
    k_param, k_state = jax.random.split(key)

    batch = 8
    state_dim = 16
    action_dim = 8
    h1, h2 = 400, 300   # module defaults

    params = init_actor_params(k_param, state_dim, action_dim, h1, h2)
    states = jax.random.normal(k_state, (batch, state_dim), jnp.float32)

    out = actor_forward(states, params)
    out = jax.block_until_ready(out)
    assert out.shape == (batch, action_dim)

    # Pure-JAX reference with identical numerics (bf16 matmul inputs, f32 acc).
    sd_p = params["w1"].shape[0]
    s_bf = jnp.pad(states, ((0, 0), (0, sd_p - state_dim))).astype(jnp.bfloat16)
    x = jnp.dot(s_bf, params["w1"], preferred_element_type=jnp.float32)
    x = jnp.maximum(x + params["b1"], 0.0)
    x = jnp.dot(x.astype(jnp.bfloat16), params["w2"],
                preferred_element_type=jnp.float32)
    x = jnp.maximum(x + params["b2"], 0.0)
    x = jnp.dot(x.astype(jnp.bfloat16), params["w3"],
                preferred_element_type=jnp.float32)
    ref = jnp.tanh(x + params["b3"])[:, :action_dim]

    np.testing.assert_allclose(np.asarray(out), np.asarray(ref),
                               rtol=1e-3, atol=1e-3)

    print("KERNEL_OK")
</pallas_src>

<mosaic_0001>
module attributes {stable_mosaic.version = 11 : i64} {
  func.func @actor_kernel(%arg0: i32, %arg1: memref<16x128xbf16, #tpu.memory_space<vmem>>, %arg2: memref<128x512xbf16, #tpu.memory_space<vmem>>, %arg3: memref<1x512xf32, #tpu.memory_space<vmem>>, %arg4: memref<512x384xbf16, #tpu.memory_space<vmem>>, %arg5: memref<1x384xf32, #tpu.memory_space<vmem>>, %arg6: memref<384x128xbf16, #tpu.memory_space<vmem>>, %arg7: memref<1x128xf32, #tpu.memory_space<vmem>>, %arg8: memref<16x128xf32, #tpu.memory_space<vmem>>) attributes {dimension_semantics = [#tpu.dimension_semantics<parallel>], iteration_bounds = array<i64: 1>, scalar_prefetch = 0 : i64, scratch_operands = 0 : i64, tpu.core_type = #tpu.core_type<tc>, window_params = [{transform_indices = @transform_0, window_bounds = array<i64: 16, 128>}, {pipeline_mode = #tpu.pipeline_mode<synchronous>, transform_indices = @transform_1, window_bounds = array<i64: 128, 512>}, {pipeline_mode = #tpu.pipeline_mode<synchronous>, transform_indices = @transform_2, window_bounds = array<i64: 1, 512>}, {pipeline_mode = #tpu.pipeline_mode<synchronous>, transform_indices = @transform_3, window_bounds = array<i64: 512, 384>}, {pipeline_mode = #tpu.pipeline_mode<synchronous>, transform_indices = @transform_4, window_bounds = array<i64: 1, 384>}, {pipeline_mode = #tpu.pipeline_mode<synchronous>, transform_indices = @transform_5, window_bounds = array<i64: 384, 128>}, {pipeline_mode = #tpu.pipeline_mode<synchronous>, transform_indices = @transform_6, window_bounds = array<i64: 1, 128>}, {transform_indices = @transform_7, window_bounds = array<i64: 16, 128>}]} {
    %c0 = arith.constant 0 : index
    %c0_0 = arith.constant 0 : index
    %0 = vector.load %arg1[%c0, %c0_0] : memref<16x128xbf16, #tpu.memory_space<vmem>>, vector<16x128xbf16>
    %c0_1 = arith.constant 0 : index
    %c0_2 = arith.constant 0 : index
    %1 = vector.load %arg2[%c0_1, %c0_2] : memref<128x512xbf16, #tpu.memory_space<vmem>>, vector<128x512xbf16>
    %cst = arith.constant dense<0.000000e+00> : vector<16x512xf32>
    %2 = tpu.matmul %0, %1, %cst {dimension_numbers = #tpu.dot_dimension_numbers<[1], [0], [0], [1], [0, 0, 1, 1], [], []>} : vector<16x128xbf16>, vector<128x512xbf16>, vector<16x512xf32> -> vector<16x512xf32>
    %c0_3 = arith.constant 0 : index
    %c0_4 = arith.constant 0 : index
    %3 = vector.load %arg3[%c0_3, %c0_4] : memref<1x512xf32, #tpu.memory_space<vmem>>, vector<1x512xf32>
    %4 = vector.broadcast %3 : vector<1x512xf32> to vector<16x512xf32>
    %5 = arith.addf %2, %4 : vector<16x512xf32>
    %cst_5 = arith.constant 0.000000e+00 : f32
    %6 = vector.broadcast %cst_5 : f32 to vector<16x512xf32>
    %7 = arith.maximumf %5, %6 : vector<16x512xf32>
    %8 = arith.truncf %7 : vector<16x512xf32> to vector<16x512xbf16>
    %c0_6 = arith.constant 0 : index
    %c0_7 = arith.constant 0 : index
    %9 = vector.load %arg4[%c0_6, %c0_7] : memref<512x384xbf16, #tpu.memory_space<vmem>>, vector<512x384xbf16>
    %cst_8 = arith.constant dense<0.000000e+00> : vector<16x384xf32>
    %10 = tpu.matmul %8, %9, %cst_8 {dimension_numbers = #tpu.dot_dimension_numbers<[1], [0], [0], [1], [0, 0, 1, 1], [], []>} : vector<16x512xbf16>, vector<512x384xbf16>, vector<16x384xf32> -> vector<16x384xf32>
    %c0_9 = arith.constant 0 : index
    %c0_10 = arith.constant 0 : index
    %11 = vector.load %arg5[%c0_9, %c0_10] : memref<1x384xf32, #tpu.memory_space<vmem>>, vector<1x384xf32>
    %12 = vector.broadcast %11 : vector<1x384xf32> to vector<16x384xf32>
    %13 = arith.addf %10, %12 : vector<16x384xf32>
    %cst_11 = arith.constant 0.000000e+00 : f32
    %14 = vector.broadcast %cst_11 : f32 to vector<16x384xf32>
    %15 = arith.maximumf %13, %14 : vector<16x384xf32>
    %16 = arith.truncf %15 : vector<16x384xf32> to vector<16x384xbf16>
    %c0_12 = arith.constant 0 : index
    %c0_13 = arith.constant 0 : index
    %17 = vector.load %arg6[%c0_12, %c0_13] : memref<384x128xbf16, #tpu.memory_space<vmem>>, vector<384x128xbf16>
    %cst_14 = arith.constant dense<0.000000e+00> : vector<16x128xf32>
    %18 = tpu.matmul %16, %17, %cst_14 {dimension_numbers = #tpu.dot_dimension_numbers<[1], [0], [0], [1], [0, 0, 1, 1], [], []>} : vector<16x384xbf16>, vector<384x128xbf16>, vector<16x128xf32> -> vector<16x128xf32>
    %c0_15 = arith.constant 0 : index
    %c0_16 = arith.constant 0 : index
    %19 = vector.load %arg7[%c0_15, %c0_16] : memref<1x128xf32, #tpu.memory_space<vmem>>, vector<1x128xf32>
    %20 = vector.broadcast %19 : vector<1x128xf32> to vector<16x128xf32>
    %21 = arith.addf %18, %20 : vector<16x128xf32>
    %22 = math.tanh %21 : vector<16x128xf32>
    %c0_17 = arith.constant 0 : index
    %c0_18 = arith.constant 0 : index
    %23 = vector.load %arg8[%c0_17, %c0_18] : memref<16x128xf32, #tpu.memory_space<vmem>>, vector<16x128xf32>
    tpu.vector_store %arg8[%c0_17, %c0_18], %22 {strides = array<i32>} : memref<16x128xf32, #tpu.memory_space<vmem>>, vector<16x128xf32>,
    return
  }
  func.func @transform_0(%arg0: i32) -> (i32, i32) {
    %c0_i32 = arith.constant 0 : i32
    %c0_i32_0 = arith.constant 0 : i32
    return %arg0, %c0_i32 : i32, i32
  }
  func.func @transform_1(%arg0: i32) -> (i32, i32) {
    %c0_i32 = arith.constant 0 : i32
    %c0_i32_0 = arith.constant 0 : i32
    %c0_i32_1 = arith.constant 0 : i32
    return %c0_i32, %c0_i32_0 : i32, i32
  }
  func.func @transform_2(%arg0: i32) -> (i32, i32) {
    %c0_i32 = arith.constant 0 : i32
    %c0_i32_0 = arith.constant 0 : i32
    %c0_i32_1 = arith.constant 0 : i32
    return %c0_i32, %c0_i32_0 : i32, i32
  }
  func.func @transform_3(%arg0: i32) -> (i32, i32) {
    %c0_i32 = arith.constant 0 : i32
    %c0_i32_0 = arith.constant 0 : i32
    %c0_i32_1 = arith.constant 0 : i32
    return %c0_i32, %c0_i32_0 : i32, i32
  }
  func.func @transform_4(%arg0: i32) -> (i32, i32) {
    %c0_i32 = arith.constant 0 : i32
    %c0_i32_0 = arith.constant 0 : i32
    %c0_i32_1 = arith.constant 0 : i32
    return %c0_i32, %c0_i32_0 : i32, i32
  }
  func.func @transform_5(%arg0: i32) -> (i32, i32) {
    %c0_i32 = arith.constant 0 : i32
    %c0_i32_0 = arith.constant 0 : i32
    %c0_i32_1 = arith.constant 0 : i32
    return %c0_i32, %c0_i32_0 : i32, i32
  }
  func.func @transform_6(%arg0: i32) -> (i32, i32) {
    %c0_i32 = arith.constant 0 : i32
    %c0_i32_0 = arith.constant 0 : i32
    %c0_i32_1 = arith.constant 0 : i32
    return %c0_i32, %c0_i32_0 : i32, i32
  }
  func.func @transform_7(%arg0: i32) -> (i32, i32) {
    %c0_i32 = arith.constant 0 : i32
    %c0_i32_0 = arith.constant 0 : i32
    return %arg0, %c0_i32 : i32, i32
  }
}

</mosaic_0001>

<llo_original>
// kernel: tpu_custom_call.1
$region0: #{tpu_custom_call.1}
  #allocation0 [shape = 'u32[]', space=smem, size = 0x4, offset = 0x4, fixed_abs, tag = 'smem constant byte address 0x4 - core index']
  #allocation1 [shape = 'u32[144,128]{1,0:T(1,128)}', space=vmem, size = 0x12000, scoped, tag = 'internal scratch']
  %s0 = inlined_call_operand.hbm [shape: bf16[16,128], index: 0, kind: input, shape index: {}]
  %s1 = inlined_call_operand.hbm [shape: bf16[128,512], index: 1, kind: input, shape index: {}]
  %s2 = inlined_call_operand.vmem [shape: f32[1,512], index: 2, kind: input, shape index: {}]
  %s3 = inlined_call_operand.hbm [shape: bf16[512,384], index: 3, kind: input, shape index: {}]
  %s4 = inlined_call_operand.vmem [shape: f32[1,384], index: 4, kind: input, shape index: {}]
  %s5 = inlined_call_operand.hbm [shape: bf16[384,128], index: 5, kind: input, shape index: {}]
  %s6 = inlined_call_operand.vmem [shape: f32[1,128], index: 6, kind: input, shape index: {}]
  %s7 = inlined_call_operand.hbm [shape: f32[16,128], index: 7, kind: output, shape index: {}]
  %s8 = sld [smem:[#allocation0]]
  $region54: #{tpu_custom_call.1} parent=0
    _
  %s10 = ssub.s32 1, %s8
  %s11 = scalar_select 0, %s10, %s8
  $region1: #{tpu_custom_call.1} parent=0
    #allocation2 [shape = 'u8[4096]{0}', space=vmem, size = 0x1000, scoped, tag = 'input window, operand 0, single buffered']
    #allocation3 [shape = 's32[1]{0}', space=sflag, size = 0x4, scoped, tag = 'scoped memory for tpu_custom_call.1']
    #allocation4 [shape = 's32[1]{0}', space=sflag, size = 0x4, scoped, tag = 'scoped memory for tpu_custom_call.1']
    #allocation5 [shape = 'u8[131072]{0}', space=vmem, size = 0x20000, scoped, tag = 'input window, operand 1, single buffered']
    #allocation6 [shape = 's32[1]{0}', space=sflag, size = 0x4, scoped, tag = 'scoped memory for tpu_custom_call.1']
    #allocation7 [shape = 'u8[393216]{0}', space=vmem, size = 0x60000, scoped, tag = 'input window, operand 3, single buffered']
    #allocation8 [shape = 'u8[98304]{0}', space=vmem, size = 0x18000, scoped, tag = 'input window, operand 5, single buffered']
    #allocation9 [shape = 's32[1]{0}', space=sflag, size = 0x4, scoped, tag = 'scoped memory for tpu_custom_call.1']
    #allocation10 [shape = 'u8[8192]{0}', space=vmem, size = 0x2000, scoped, tag = 'output window, operand 0, single buffered']
    %12 = vsyncpa [#allocation3], 0
    %13 = vsyncpa [#allocation6], 0
    %14 = vsyncpa [#allocation9], 0
    %15 = vsyncpa [#allocation4], 0
    // Predicated region
    $region2: #{tpu_custom_call.1} parent=1 // pred_check
      _
    $region3: #{tpu_custom_call.1} parent=1 // pred_check_branch
      %17 = sbr.rel (0) target = $region5
    $region4: #{tpu_custom_call.1} parent=1 // pred_region
      %s19 = ssub.s32 128, 128
      %20 = vsyncadd [#allocation3], %s19
      %s21 = sshll.u32 [#allocation2], 4
      %s22 = int_to_ptr.vmem [resolvable:$true] %s21
      %27 = dma.hbm_to_vmem [thread:$0]  %s0, 128, %s22, [#allocation3], 64, 64, 4
    $region5: #{tpu_custom_call.1} parent=1 // pred_fallthru
      _
    // Predicated region
    $region6: #{tpu_custom_call.1} parent=1 // pred_check
      _
    $region7: #{tpu_custom_call.1} parent=1 // pred_check_branch
      %29 = sbr.rel (0) target = $region9
    $region8: #{tpu_custom_call.1} parent=1 // pred_region
      %s31 = ssub.s32 4096, 4096
      %32 = vsyncadd [#allocation6], %s31
      %s33 = sshll.u32 [#allocation5], 4
      %s34 = int_to_ptr.vmem [resolvable:$true] %s33
      %39 = dma.hbm_to_vmem [thread:$0]  %s1, 4096, %s34, [#allocation6], 256, 256, 16
    $region9: #{tpu_custom_call.1} parent=1 // pred_fallthru
      _
    // Predicated region
    $region10: #{tpu_custom_call.1} parent=1 // pred_check
      _
    $region11: #{tpu_custom_call.1} parent=1 // pred_check_branch
      %41 = sbr.rel (0) target = $region13
    $region12: #{tpu_custom_call.1} parent=1 // pred_region
      _
    $region13: #{tpu_custom_call.1} parent=1 // pred_fallthru
      _
    // Predicated region
    $region14: #{tpu_custom_call.1} parent=1 // pred_check
      _
    $region15: #{tpu_custom_call.1} parent=1 // pred_check_branch
      %43 = sbr.rel (0) target = $region17
    $region16: #{tpu_custom_call.1} parent=1 // pred_region
      %s45 = ssub.s32 12288, 12288
      %46 = vsyncadd [#allocation6], %s45
      %s47 = sshll.u32 [#allocation7], 4
      %s48 = int_to_ptr.vmem [resolvable:$true] %s47
      %53 = dma.hbm_to_vmem [thread:$0]  %s3, 12288, %s48, [#allocation6], 192, 192, 12
    $region17: #{tpu_custom_call.1} parent=1 // pred_fallthru
      _
    // Predicated region
    $region18: #{tpu_custom_call.1} parent=1 // pred_check
      _
    $region19: #{tpu_custom_call.1} parent=1 // pred_check_branch
      %55 = sbr.rel (0) target = $region21
    $region20: #{tpu_custom_call.1} parent=1 // pred_region
      _
    $region21: #{tpu_custom_call.1} parent=1 // pred_fallthru
      _
    // Predicated region
    $region22: #{tpu_custom_call.1} parent=1 // pred_check
      _
    $region23: #{tpu_custom_call.1} parent=1 // pred_check_branch
      %57 = sbr.rel (0) target = $region25
    $region24: #{tpu_custom_call.1} parent=1 // pred_region
      %s59 = ssub.s32 3072, 3072
      %60 = vsyncadd [#allocation9], %s59
      %s61 = sshll.u32 [#allocation8], 4
      %s62 = int_to_ptr.vmem [resolvable:$true] %s61
      %67 = dma.hbm_to_vmem [thread:$0]  %s5, 3072, %s62, [#allocation9], 64, 64, 4
    $region25: #{tpu_custom_call.1} parent=1 // pred_fallthru
      _
    // Predicated region
    $region26: #{tpu_custom_call.1} parent=1 // pred_check
      _
    $region27: #{tpu_custom_call.1} parent=1 // pred_check_branch
      %69 = sbr.rel (0) target = $region29
    $region28: #{tpu_custom_call.1} parent=1 // pred_region
      _
    $region29: #{tpu_custom_call.1} parent=1 // pred_fallthru
      _
    // Predicated region
    $region30: #{tpu_custom_call.1} parent=1 // pred_check
      _
    $region31: #{tpu_custom_call.1} parent=1 // pred_check_branch
      %71 = sbr.rel (0) target = $region33
    $region32: #{tpu_custom_call.1} parent=1 // pred_region
      %72 = dma.done [#allocation3], 128
    $region33: #{tpu_custom_call.1} parent=1 // pred_fallthru
      _
    // Predicated region
    $region34: #{tpu_custom_call.1} parent=1 // pred_check
      _
    $region35: #{tpu_custom_call.1} parent=1 // pred_check_branch
      %74 = sbr.rel (0) target = $region37
    $region36: #{tpu_custom_call.1} parent=1 // pred_region
      %75 = dma.done [#allocation6], 4096
    $region37: #{tpu_custom_call.1} parent=1 // pred_fallthru
      _
    // Predicated region
    $region38: #{tpu_custom_call.1} parent=1 // pred_check
      _
    $region39: #{tpu_custom_call.1} parent=1 // pred_check_branch
      %77 = sbr.rel (0) target = $region41
    $region40: #{tpu_custom_call.1} parent=1 // pred_region
      %78 = dma.done [#allocation6], 12288
    $region41: #{tpu_custom_call.1} parent=1 // pred_fallthru
      _
    // Predicated region
    $region42: #{tpu_custom_call.1} parent=1 // pred_check
      _
    $region43: #{tpu_custom_call.1} parent=1 // pred_check_branch
      %80 = sbr.rel (0) target = $region45
    $region44: #{tpu_custom_call.1} parent=1 // pred_region
      %81 = dma.done [#allocation9], 3072
    $region45: #{tpu_custom_call.1} parent=1 // pred_fallthru
      _
    %v83 = vld [vmem:[#allocation2] sm:$0xf]
    %v84 = vld [vmem:[#allocation2 + $0x4] sm:$0xf]
    %v85 = vld [vmem:[#allocation5] sm:$0xff]
    %v86 = vld [vmem:[#allocation5 + $0x8] sm:$0xff]
    %v87 = vld [vmem:[#allocation5 + $0x10] sm:$0xff]
    %v88 = vld [vmem:[#allocation5 + $0x18] sm:$0xff]
    %v89 = vld [vmem:[#allocation5 + $0x20] sm:$0xff]
    %v90 = vld [vmem:[#allocation5 + $0x28] sm:$0xff]
    %v91 = vld [vmem:[#allocation5 + $0x30] sm:$0xff]
    %v92 = vld [vmem:[#allocation5 + $0x38] sm:$0xff]
    %v93 = vld [vmem:[#allocation5 + $0x40] sm:$0xff]
    %v94 = vld [vmem:[#allocation5 + $0x48] sm:$0xff]
    %v95 = vld [vmem:[#allocation5 + $0x50] sm:$0xff]
    %v96 = vld [vmem:[#allocation5 + $0x58] sm:$0xff]
    %v97 = vld [vmem:[#allocation5 + $0x60] sm:$0xff]
    %v98 = vld [vmem:[#allocation5 + $0x68] sm:$0xff]
    %v99 = vld [vmem:[#allocation5 + $0x70] sm:$0xff]
    %v100 = vld [vmem:[#allocation5 + $0x78] sm:$0xff]
    %v101 = vld [vmem:[#allocation5 + $0x80] sm:$0xff]
    %v102 = vld [vmem:[#allocation5 + $0x88] sm:$0xff]
    %v103 = vld [vmem:[#allocation5 + $0x90] sm:$0xff]
    %v104 = vld [vmem:[#allocation5 + $0x98] sm:$0xff]
    %v105 = vld [vmem:[#allocation5 + $0xa0] sm:$0xff]
    %v106 = vld [vmem:[#allocation5 + $0xa8] sm:$0xff]
    %v107 = vld [vmem:[#allocation5 + $0xb0] sm:$0xff]
    %v108 = vld [vmem:[#allocation5 + $0xb8] sm:$0xff]
    %v109 = vld [vmem:[#allocation5 + $0xc0] sm:$0xff]
    %v110 = vld [vmem:[#allocation5 + $0xc8] sm:$0xff]
    %v111 = vld [vmem:[#allocation5 + $0xd0] sm:$0xff]
    %v112 = vld [vmem:[#allocation5 + $0xd8] sm:$0xff]
    %v113 = vld [vmem:[#allocation5 + $0xe0] sm:$0xff]
    %v114 = vld [vmem:[#allocation5 + $0xe8] sm:$0xff]
    %v115 = vld [vmem:[#allocation5 + $0xf0] sm:$0xff]
    %v116 = vld [vmem:[#allocation5 + $0xf8] sm:$0xff]
    %v117 = vld [vmem:[%s2] sm:$0xf]
    %v119 = vlaneseq
    %v120 = vshrl.u32 %v119, 7
    %v121 = vsub.s32 0, %v120
    %v122 = vrot.slane %v117, %v121
    %v123 = vlaneseq
    %v124 = vshrl.u32 %v123, 7
    %v125 = vsub.s32 1, %v124
    %v126 = vrot.slane %v117, %v125
    %v127 = vlaneseq
    %v128 = vshrl.u32 %v127, 7
    %v129 = vsub.s32 2, %v128
    %v130 = vrot.slane %v117, %v129
    %v131 = vlaneseq
    %v132 = vshrl.u32 %v131, 7
    %v133 = vsub.s32 3, %v132
    %v134 = vrot.slane %v117, %v133
    %v141 = vunpack.c.l.b16 %v83
    %v142 = vunpack.c.l.b16 %v84
    %v143 = vpack.c.b16 %v142, %v141
    %v177 = vunpack.c.l.b16 %v85
    %v178 = vunpack.c.h.b16 %v85
    %v179 = vunpack.c.l.b16 %v86
    %v180 = vunpack.c.h.b16 %v86
    %v181 = vunpack.c.l.b16 %v87
    %v182 = vunpack.c.h.b16 %v87
    %v183 = vunpack.c.l.b16 %v88
    %v184 = vunpack.c.h.b16 %v88
    %v185 = vunpack.c.l.b16 %v89
    %v186 = vunpack.c.h.b16 %v89
    %v187 = vunpack.c.l.b16 %v90
    %v188 = vunpack.c.h.b16 %v90
    %v189 = vunpack.c.l.b16 %v91
    %v190 = vunpack.c.h.b16 %v91
    %v191 = vunpack.c.l.b16 %v92
    %v192 = vunpack.c.h.b16 %v92
    %v193 = vunpack.c.l.b16 %v93
    %v194 = vunpack.c.h.b16 %v93
    %v195 = vunpack.c.l.b16 %v94
    %v196 = vunpack.c.h.b16 %v94
    %v197 = vunpack.c.l.b16 %v95
    %v198 = vunpack.c.h.b16 %v95
    %v199 = vunpack.c.l.b16 %v96
    %v200 = vunpack.c.h.b16 %v96
    %v201 = vunpack.c.l.b16 %v97
    %v202 = vunpack.c.h.b16 %v97
    %v203 = vunpack.c.l.b16 %v98
    %v204 = vunpack.c.h.b16 %v98
    %v205 = vunpack.c.l.b16 %v99
    %v206 = vunpack.c.h.b16 %v99
    %v207 = vunpack.c.l.b16 %v100
    %v208 = vunpack.c.h.b16 %v100
    %v209 = vunpack.c.l.b16 %v101
    %v210 = vunpack.c.h.b16 %v101
    %v211 = vunpack.c.l.b16 %v102
    %v212 = vunpack.c.h.b16 %v102
    %v213 = vunpack.c.l.b16 %v103
    %v214 = vunpack.c.h.b16 %v103
    %v215 = vunpack.c.l.b16 %v104
    %v216 = vunpack.c.h.b16 %v104
    %v217 = vunpack.c.l.b16 %v105
    %v218 = vunpack.c.h.b16 %v105
    %v219 = vunpack.c.l.b16 %v106
    %v220 = vunpack.c.h.b16 %v106
    %v221 = vunpack.c.l.b16 %v107
    %v222 = vunpack.c.h.b16 %v107
    %v223 = vunpack.c.l.b16 %v108
    %v224 = vunpack.c.h.b16 %v108
    %v225 = vunpack.c.l.b16 %v109
    %v226 = vunpack.c.h.b16 %v109
    %v227 = vunpack.c.l.b16 %v110
    %v228 = vunpack.c.h.b16 %v110
    %v229 = vunpack.c.l.b16 %v111
    %v230 = vunpack.c.h.b16 %v111
    %v231 = vunpack.c.l.b16 %v112
    %v232 = vunpack.c.h.b16 %v112
    %v233 = vunpack.c.l.b16 %v113
    %v234 = vunpack.c.h.b16 %v113
    %v235 = vunpack.c.l.b16 %v114
    %v236 = vunpack.c.h.b16 %v114
    %v237 = vunpack.c.l.b16 %v115
    %v238 = vunpack.c.h.b16 %v115
    %v239 = vunpack.c.l.b16 %v116
    %v240 = vunpack.c.h.b16 %v116
    %v241 = vpack.c.b16 %v181, %v177
    %v242 = vpack.c.b16 %v182, %v178
    %v243 = vpack.c.b16 %v183, %v179
    %v244 = vpack.c.b16 %v184, %v180
    %v245 = vpack.c.b16 %v189, %v185
    %v246 = vpack.c.b16 %v190, %v186
    %v247 = vpack.c.b16 %v191, %v187
    %v248 = vpack.c.b16 %v192, %v188
    %v249 = vpack.c.b16 %v197, %v193
    %v250 = vpack.c.b16 %v198, %v194
    %v251 = vpack.c.b16 %v199, %v195
    %v252 = vpack.c.b16 %v200, %v196
    %v253 = vpack.c.b16 %v205, %v201
    %v254 = vpack.c.b16 %v206, %v202
    %v255 = vpack.c.b16 %v207, %v203
    %v256 = vpack.c.b16 %v208, %v204
    %v257 = vpack.c.b16 %v213, %v209
    %v258 = vpack.c.b16 %v214, %v210
    %v259 = vpack.c.b16 %v215, %v211
    %v260 = vpack.c.b16 %v216, %v212
    %v261 = vpack.c.b16 %v221, %v217
    %v262 = vpack.c.b16 %v222, %v218
    %v263 = vpack.c.b16 %v223, %v219
    %v264 = vpack.c.b16 %v224, %v220
    %v265 = vpack.c.b16 %v229, %v225
    %v266 = vpack.c.b16 %v230, %v226
    %v267 = vpack.c.b16 %v231, %v227
    %v268 = vpack.c.b16 %v232, %v228
    %v269 = vpack.c.b16 %v237, %v233
    %v270 = vpack.c.b16 %v238, %v234
    %v271 = vpack.c.b16 %v239, %v235
    %v272 = vpack.c.b16 %v240, %v236
    %305 = vmatprep.subr.bf16.mxu0 %v242
    %306 = vmatpush1.bf16.msra.mxu0 %v241
    %307 = vmatprep.subr.bf16.mxu0 %v246
    %308 = vmatpush1.bf16.msra.mxu0 %v245
    %309 = vmatprep.subr.bf16.mxu0 %v250
    %310 = vmatpush1.bf16.msra.mxu0 %v249
    %311 = vmatprep.subr.bf16.mxu0 %v254
    %312 = vmatpush1.bf16.msra.mxu0 %v253
    %313 = vmatprep.subr.bf16.mxu0 %v258
    %314 = vmatpush1.bf16.msra.mxu0 %v257
    %315 = vmatprep.subr.bf16.mxu0 %v262
    %316 = vmatpush1.bf16.msra.mxu0 %v261
    %317 = vmatprep.subr.bf16.mxu0 %v266
    %318 = vmatpush1.bf16.msra.mxu0 %v265
    %319 = vmatprep.subr.bf16.mxu0 %v270
    %320 = vmatpush1.bf16.msra.mxu0 %v269
    %321 = vmatprep.subr.bf16.mxu0 0
    %322 = vmatpush1.bf16.msra.mxu0 0
    %323 = vmatprep.subr.bf16.mxu0 0
    %324 = vmatpush1.bf16.msra.mxu0 0
    %325 = vmatprep.subr.bf16.mxu0 0
    %326 = vmatpush1.bf16.msra.mxu0 0
    %327 = vmatprep.subr.bf16.mxu0 0
    %328 = vmatpush1.bf16.msra.mxu0 0
    %329 = vmatprep.subr.bf16.mxu0 0
    %330 = vmatpush1.bf16.msra.mxu0 0
    %331 = vmatprep.subr.bf16.mxu0 0
    %332 = vmatpush1.bf16.msra.mxu0 0
    %333 = vmatprep.subr.bf16.mxu0 0
    %334 = vmatpush1.bf16.msra.mxu0 0
    %335 = vmatprep.subr.bf16.mxu0 0
    %336 = vmatpush1.bf16.msra.mxu0 0
    %337 = vmatprep.mubr.bf16.mxu0 0
    %338 = vmatmul.mubr.bf16.gmra.mrb[0].mxu0 %v143
    %v339 = vpop.f32.mrb[0].mxu0
    %v340 = vadd.f32 %v122, %v339
    %v341 = vpop.f32.mrb[0].mxu0
    %v342 = vadd.f32 %v126, %v341
    %v343 = vpop.f32.mrb[0].mxu0
    %v344 = vadd.f32 %v122, %v343
    %v345 = vpop.f32.mrb[0].mxu0
    %v346 = vadd.f32 %v126, %v345
    %347 = vdwg.mxu0
    %348 = vmatprep.subr.bf16.mxu0 %v244
    %349 = vmatpush1.bf16.msra.mxu0 %v243
    %350 = vmatprep.subr.bf16.mxu0 %v248
    %351 = vmatpush1.bf16.msra.mxu0 %v247
    %352 = vmatprep.subr.bf16.mxu0 %v252
    %353 = vmatpush1.bf16.msra.mxu0 %v251
    %354 = vmatprep.subr.bf16.mxu0 %v256
    %355 = vmatpush1.bf16.msra.mxu0 %v255
    %356 = vmatprep.subr.bf16.mxu0 %v260
    %357 = vmatpush1.bf16.msra.mxu0 %v259
    %358 = vmatprep.subr.bf16.mxu0 %v264
    %359 = vmatpush1.bf16.msra.mxu0 %v263
    %360 = vmatprep.subr.bf16.mxu0 %v268
    %361 = vmatpush1.bf16.msra.mxu0 %v267
    %362 = vmatprep.subr.bf16.mxu0 %v272
    %363 = vmatpush1.bf16.msra.mxu0 %v271
    %364 = vmatprep.subr.bf16.mxu0 0
    %365 = vmatpush1.bf16.msra.mxu0 0
    %366 = vmatprep.subr.bf16.mxu0 0
    %367 = vmatpush1.bf16.msra.mxu0 0
    %368 = vmatprep.subr.bf16.mxu0 0
    %369 = vmatpush1.bf16.msra.mxu0 0
    %370 = vmatprep.subr.bf16.mxu0 0
    %371 = vmatpush1.bf16.msra.mxu0 0
    %372 = vmatprep.subr.bf16.mxu0 0
    %373 = vmatpush1.bf16.msra.mxu0 0
    %374 = vmatprep.subr.bf16.mxu0 0
    %375 = vmatpush1.bf16.msra.mxu0 0
    %376 = vmatprep.subr.bf16.mxu0 0
    %377 = vmatpush1.bf16.msra.mxu0 0
    %378 = vmatprep.subr.bf16.mxu0 0
    %379 = vmatpush1.bf16.msra.mxu0 0
    %380 = vmatprep.mubr.bf16.mxu0 0
    %381 = vmatmul.mubr.bf16.gmra.mrb[0].mxu0 %v143
    %v382 = vpop.f32.mrb[0].mxu0
    %v383 = vadd.f32 %v130, %v382
    %v384 = vpop.f32.mrb[0].mxu0
    %v385 = vadd.f32 %v134, %v384
    %v386 = vpop.f32.mrb[0].mxu0
    %v387 = vadd.f32 %v130, %v386
    %v388 = vpop.f32.mrb[0].mxu0
    %v389 = vadd.f32 %v134, %v388
    %390 = vdwg.mxu0
    %v391 = vmax.f32 %v340, 0.0
    %v392 = vmax.f32 %v342, 0.0
    %v393 = vmax.f32 %v383, 0.0
    %v394 = vmax.f32 %v385, 0.0
    %v395 = vmax.f32 %v344, 0.0
    %v396 = vmax.f32 %v346, 0.0
    %v397 = vmax.f32 %v387, 0.0
    %v398 = vmax.f32 %v389, 0.0
    %v399 = vpack.c.bf16 %v395, %v391
    %v400 = vpack.c.bf16 %v396, %v392
    %v401 = vpack.c.bf16 %v397, %v393
    %v402 = vpack.c.bf16 %v398, %v394
    %v403 = vld [vmem:[#allocation7] sm:$0xff]
    %v404 = vld [vmem:[#allocation7 + $0x8] sm:$0xf]
    %v405 = vld [vmem:[#allocation7 + $0xc] sm:$0xff]
    %v406 = vld [vmem:[#allocation7 + $0x14] sm:$0xf]
    %v407 = vld [vmem:[#allocation7 + $0x18] sm:$0xff]
    %v408 = vld [vmem:[#allocation7 + $0x20] sm:$0xf]
    %v409 = vld [vmem:[#allocation7 + $0x24] sm:$0xff]
    %v410 = vld [vmem:[#allocation7 + $0x2c] sm:$0xf]
    %v411 = vld [vmem:[#allocation7 + $0x30] sm:$0xff]
    %v412 = vld [vmem:[#allocation7 + $0x38] sm:$0xf]
    %v413 = vld [vmem:[#allocation7 + $0x3c] sm:$0xff]
    %v414 = vld [vmem:[#allocation7 + $0x44] sm:$0xf]
    %v415 = vld [vmem:[#allocation7 + $0x48] sm:$0xff]
    %v416 = vld [vmem:[#allocation7 + $0x50] sm:$0xf]
    %v417 = vld [vmem:[#allocation7 + $0x54] sm:$0xff]
    %v418 = vld [vmem:[#allocation7 + $0x5c] sm:$0xf]
    %v419 = vld [vmem:[#allocation7 + $0x60] sm:$0xff]
    %v420 = vld [vmem:[#allocation7 + $0x68] sm:$0xf]
    %v421 = vld [vmem:[#allocation7 + $0x6c] sm:$0xff]
    %v422 = vld [vmem:[#allocation7 + $0x74] sm:$0xf]
    %v423 = vld [vmem:[#allocation7 + $0x78] sm:$0xff]
    %v424 = vld [vmem:[#allocation7 + $0x80] sm:$0xf]
    %v425 = vld [vmem:[#allocation7 + $0x84] sm:$0xff]
    %v426 = vld [vmem:[#allocation7 + $0x8c] sm:$0xf]
    %v427 = vld [vmem:[#allocation7 + $0x90] sm:$0xff]
    %v428 = vld [vmem:[#allocation7 + $0x98] sm:$0xf]
    %v429 = vld [vmem:[#allocation7 + $0x9c] sm:$0xff]
    %v430 = vld [vmem:[#allocation7 + $0xa4] sm:$0xf]
    %v431 = vld [vmem:[#allocation7 + $0xa8] sm:$0xff]
    %v432 = vld [vmem:[#allocation7 + $0xb0] sm:$0xf]
    %v433 = vld [vmem:[#allocation7 + $0xb4] sm:$0xff]
    %v434 = vld [vmem:[#allocation7 + $0xbc] sm:$0xf]
    %v435 = vld [vmem:[#allocation7 + $0xc0] sm:$0xff]
    %v436 = vld [vmem:[#allocation7 + $0xc8] sm:$0xf]
    %v437 = vld [vmem:[#allocation7 + $0xcc] sm:$0xff]
    %v438 = vld [vmem:[#allocation7 + $0xd4] sm:$0xf]
    %v439 = vld [vmem:[#allocation7 + $0xd8] sm:$0xff]
    %v440 = vld [vmem:[#allocation7 + $0xe0] sm:$0xf]
    %v441 = vld [vmem:[#allocation7 + $0xe4] sm:$0xff]
    %v442 = vld [vmem:[#allocation7 + $0xec] sm:$0xf]
    %v443 = vld [vmem:[#allocation7 + $0xf0] sm:$0xff]
    %v444 = vld [vmem:[#allocation7 + $0xf8] sm:$0xf]
    %v445 = vld [vmem:[#allocation7 + $0xfc] sm:$0xff]
    %v446 = vld [vmem:[#allocation7 + $0x104] sm:$0xf]
    %v447 = vld [vmem:[#allocation7 + $0x108] sm:$0xff]
    %v448 = vld [vmem:[#allocation7 + $0x110] sm:$0xf]
    %v449 = vld [vmem:[#allocation7 + $0x114] sm:$0xff]
    %v450 = vld [vmem:[#allocation7 + $0x11c] sm:$0xf]
    %v451 = vld [vmem:[#allocation7 + $0x120] sm:$0xff]
    %v452 = vld [vmem:[#allocation7 + $0x128] sm:$0xf]
    %v453 = vld [vmem:[#allocation7 + $0x12c] sm:$0xff]
    %v454 = vld [vmem:[#allocation7 + $0x134] sm:$0xf]
    %v455 = vld [vmem:[#allocation7 + $0x138] sm:$0xff]
    %v456 = vld [vmem:[#allocation7 + $0x140] sm:$0xf]
    %v457 = vld [vmem:[#allocation7 + $0x144] sm:$0xff]
    %v458 = vld [vmem:[#allocation7 + $0x14c] sm:$0xf]
    %v459 = vld [vmem:[#allocation7 + $0x150] sm:$0xff]
    %v460 = vld [vmem:[#allocation7 + $0x158] sm:$0xf]
    %v461 = vld [vmem:[#allocation7 + $0x15c] sm:$0xff]
    %v462 = vld [vmem:[#allocation7 + $0x164] sm:$0xf]
    %v463 = vld [vmem:[#allocation7 + $0x168] sm:$0xff]
    %v464 = vld [vmem:[#allocation7 + $0x170] sm:$0xf]
    %v465 = vld [vmem:[#allocation7 + $0x174] sm:$0xff]
    %v466 = vld [vmem:[#allocation7 + $0x17c] sm:$0xf]
    %v467 = vld [vmem:[#allocation7 + $0x180] sm:$0xff]
    %v468 = vld [vmem:[#allocation7 + $0x188] sm:$0xf]
    %v469 = vld [vmem:[#allocation7 + $0x18c] sm:$0xff]
    %v470 = vld [vmem:[#allocation7 + $0x194] sm:$0xf]
    %v471 = vld [vmem:[#allocation7 + $0x198] sm:$0xff]
    %v472 = vld [vmem:[#allocation7 + $0x1a0] sm:$0xf]
    %v473 = vld [vmem:[#allocation7 + $0x1a4] sm:$0xff]
    %v474 = vld [vmem:[#allocation7 + $0x1ac] sm:$0xf]
    %v475 = vld [vmem:[#allocation7 + $0x1b0] sm:$0xff]
    %v476 = vld [vmem:[#allocation7 + $0x1b8] sm:$0xf]
    %v477 = vld [vmem:[#allocation7 + $0x1bc] sm:$0xff]
    %v478 = vld [vmem:[#allocation7 + $0x1c4] sm:$0xf]
    %v479 = vld [vmem:[#allocation7 + $0x1c8] sm:$0xff]
    %v480 = vld [vmem:[#allocation7 + $0x1d0] sm:$0xf]
    %v481 = vld [vmem:[#allocation7 + $0x1d4] sm:$0xff]
    %v482 = vld [vmem:[#allocation7 + $0x1dc] sm:$0xf]
    %v483 = vld [vmem:[#allocation7 + $0x1e0] sm:$0xff]
    %v484 = vld [vmem:[#allocation7 + $0x1e8] sm:$0xf]
    %v485 = vld [vmem:[#allocation7 + $0x1ec] sm:$0xff]
    %v486 = vld [vmem:[#allocation7 + $0x1f4] sm:$0xf]
    %v487 = vld [vmem:[#allocation7 + $0x1f8] sm:$0xff]
    %v488 = vld [vmem:[#allocation7 + $0x200] sm:$0xf]
    %v489 = vld [vmem:[#allocation7 + $0x204] sm:$0xff]
    %v490 = vld [vmem:[#allocation7 + $0x20c] sm:$0xf]
    %v491 = vld [vmem:[#allocation7 + $0x210] sm:$0xff]
    %v492 = vld [vmem:[#allocation7 + $0x218] sm:$0xf]
    %v493 = vld [vmem:[#allocation7 + $0x21c] sm:$0xff]
    %v494 = vld [vmem:[#allocation7 + $0x224] sm:$0xf]
    %v495 = vld [vmem:[#allocation7 + $0x228] sm:$0xff]
    %v496 = vld [vmem:[#allocation7 + $0x230] sm:$0xf]
    %v497 = vld [vmem:[#allocation7 + $0x234] sm:$0xff]
    %v498 = vld [vmem:[#allocation7 + $0x23c] sm:$0xf]
    %v499 = vld [vmem:[#allocation7 + $0x240] sm:$0xff]
    %v500 = vld [vmem:[#allocation7 + $0x248] sm:$0xf]
    %v501 = vld [vmem:[#allocation7 + $0x24c] sm:$0xff]
    %v502 = vld [vmem:[#allocation7 + $0x254] sm:$0xf]
    %v503 = vld [vmem:[#allocation7 + $0x258] sm:$0xff]
    %v504 = vld [vmem:[#allocation7 + $0x260] sm:$0xf]
    %v505 = vld [vmem:[#allocation7 + $0x264] sm:$0xff]
    %v506 = vld [vmem:[#allocation7 + $0x26c] sm:$0xf]
    %v507 = vld [vmem:[#allocation7 + $0x270] sm:$0xff]
    %v508 = vld [vmem:[#allocation7 + $0x278] sm:$0xf]
    %v509 = vld [vmem:[#allocation7 + $0x27c] sm:$0xff]
    %v510 = vld [vmem:[#allocation7 + $0x284] sm:$0xf]
    %v511 = vld [vmem:[#allocation7 + $0x288] sm:$0xff]
    %v512 = vld [vmem:[#allocation7 + $0x290] sm:$0xf]
    %v513 = vld [vmem:[#allocation7 + $0x294] sm:$0xff]
    %v514 = vld [vmem:[#allocation7 + $0x29c] sm:$0xf]
    %v515 = vld [vmem:[#allocation7 + $0x2a0] sm:$0xff]
    %v516 = vld [vmem:[#allocation7 + $0x2a8] sm:$0xf]
    %v517 = vld [vmem:[#allocation7 + $0x2ac] sm:$0xff]
    %v518 = vld [vmem:[#allocation7 + $0x2b4] sm:$0xf]
    %v519 = vld [vmem:[#allocation7 + $0x2b8] sm:$0xff]
    %v520 = vld [vmem:[#allocation7 + $0x2c0] sm:$0xf]
    %v521 = vld [vmem:[#allocation7 + $0x2c4] sm:$0xff]
    %v522 = vld [vmem:[#allocation7 + $0x2cc] sm:$0xf]
    %v523 = vld [vmem:[#allocation7 + $0x2d0] sm:$0xff]
    %v524 = vld [vmem:[#allocation7 + $0x2d8] sm:$0xf]
    %v525 = vld [vmem:[#allocation7 + $0x2dc] sm:$0xff]
    %v526 = vld [vmem:[#allocation7 + $0x2e4] sm:$0xf]
    %v527 = vld [vmem:[#allocation7 + $0x2e8] sm:$0xff]
    %v528 = vld [vmem:[#allocation7 + $0x2f0] sm:$0xf]
    %v529 = vld [vmem:[#allocation7 + $0x2f4] sm:$0xff]
    %v530 = vld [vmem:[#allocation7 + $0x2fc] sm:$0xf]
    %v531 = vld [vmem:[%s4] sm:$0x7]
    %v533 = vlaneseq
    %v534 = vshrl.u32 %v533, 7
    %v535 = vsub.s32 0, %v534
    %v536 = vrot.slane %v531, %v535
    %v537 = vlaneseq
    %v538 = vshrl.u32 %v537, 7
    %v539 = vsub.s32 1, %v538
    %v540 = vrot.slane %v531, %v539
    %v541 = vlaneseq
    %v542 = vshrl.u32 %v541, 7
    %v543 = vsub.s32 2, %v542
    %v544 = vrot.slane %v531, %v543
    %v676 = vunpack.c.l.b16 %v403
    %v677 = vunpack.c.h.b16 %v403
    %v678 = vunpack.c.l.b16 %v404
    %v679 = vunpack.c.l.b16 %v405
    %v680 = vunpack.c.h.b16 %v405
    %v681 = vunpack.c.l.b16 %v406
    %v682 = vunpack.c.l.b16 %v407
    %v683 = vunpack.c.h.b16 %v407
    %v684 = vunpack.c.l.b16 %v408
    %v685 = vunpack.c.l.b16 %v409
    %v686 = vunpack.c.h.b16 %v409
    %v687 = vunpack.c.l.b16 %v410
    %v688 = vunpack.c.l.b16 %v411
    %v689 = vunpack.c.h.b16 %v411
    %v690 = vunpack.c.l.b16 %v412
    %v691 = vunpack.c.l.b16 %v413
    %v692 = vunpack.c.h.b16 %v413
    %v693 = vunpack.c.l.b16 %v414
    %v694 = vunpack.c.l.b16 %v415
    %v695 = vunpack.c.h.b16 %v415
    %v696 = vunpack.c.l.b16 %v416
    %v697 = vunpack.c.l.b16 %v417
    %v698 = vunpack.c.h.b16 %v417
    %v699 = vunpack.c.l.b16 %v418
    %v700 = vunpack.c.l.b16 %v419
    %v701 = vunpack.c.h.b16 %v419
    %v702 = vunpack.c.l.b16 %v420
    %v703 = vunpack.c.l.b16 %v421
    %v704 = vunpack.c.h.b16 %v421
    %v705 = vunpack.c.l.b16 %v422
    %v706 = vunpack.c.l.b16 %v423
    %v707 = vunpack.c.h.b16 %v423
    %v708 = vunpack.c.l.b16 %v424
    %v709 = vunpack.c.l.b16 %v425
    %v710 = vunpack.c.h.b16 %v425
    %v711 = vunpack.c.l.b16 %v426
    %v712 = vunpack.c.l.b16 %v427
    %v713 = vunpack.c.h.b16 %v427
    %v714 = vunpack.c.l.b16 %v428
    %v715 = vunpack.c.l.b16 %v429
    %v716 = vunpack.c.h.b16 %v429
    %v717 = vunpack.c.l.b16 %v430
    %v718 = vunpack.c.l.b16 %v431
    %v719 = vunpack.c.h.b16 %v431
    %v720 = vunpack.c.l.b16 %v432
    %v721 = vunpack.c.l.b16 %v433
    %v722 = vunpack.c.h.b16 %v433
    %v723 = vunpack.c.l.b16 %v434
    %v724 = vunpack.c.l.b16 %v435
    %v725 = vunpack.c.h.b16 %v435
    %v726 = vunpack.c.l.b16 %v436
    %v727 = vunpack.c.l.b16 %v437
    %v728 = vunpack.c.h.b16 %v437
    %v729 = vunpack.c.l.b16 %v438
    %v730 = vunpack.c.l.b16 %v439
    %v731 = vunpack.c.h.b16 %v439
    %v732 = vunpack.c.l.b16 %v440
    %v733 = vunpack.c.l.b16 %v441
    %v734 = vunpack.c.h.b16 %v441
    %v735 = vunpack.c.l.b16 %v442
    %v736 = vunpack.c.l.b16 %v443
    %v737 = vunpack.c.h.b16 %v443
    %v738 = vunpack.c.l.b16 %v444
    %v739 = vunpack.c.l.b16 %v445
    %v740 = vunpack.c.h.b16 %v445
    %v741 = vunpack.c.l.b16 %v446
    %v742 = vunpack.c.l.b16 %v447
    %v743 = vunpack.c.h.b16 %v447
    %v744 = vunpack.c.l.b16 %v448
    %v745 = vunpack.c.l.b16 %v449
    %v746 = vunpack.c.h.b16 %v449
    %v747 = vunpack.c.l.b16 %v450
    %v748 = vunpack.c.l.b16 %v451
    %v749 = vunpack.c.h.b16 %v451
    %v750 = vunpack.c.l.b16 %v452
    %v751 = vunpack.c.l.b16 %v453
    %v752 = vunpack.c.h.b16 %v453
    %v753 = vunpack.c.l.b16 %v454
    %v754 = vunpack.c.l.b16 %v455
    %v755 = vunpack.c.h.b16 %v455
    %v756 = vunpack.c.l.b16 %v456
    %v757 = vunpack.c.l.b16 %v457
    %v758 = vunpack.c.h.b16 %v457
    %v759 = vunpack.c.l.b16 %v458
    %v760 = vunpack.c.l.b16 %v459
    %v761 = vunpack.c.h.b16 %v459
    %v762 = vunpack.c.l.b16 %v460
    %v763 = vunpack.c.l.b16 %v461
    %v764 = vunpack.c.h.b16 %v461
    %v765 = vunpack.c.l.b16 %v462
    %v766 = vunpack.c.l.b16 %v463
    %v767 = vunpack.c.h.b16 %v463
    %v768 = vunpack.c.l.b16 %v464
    %v769 = vunpack.c.l.b16 %v465
    %v770 = vunpack.c.h.b16 %v465
    %v771 = vunpack.c.l.b16 %v466
    %v772 = vunpack.c.l.b16 %v467
    %v773 = vunpack.c.h.b16 %v467
    %v774 = vunpack.c.l.b16 %v468
    %v775 = vunpack.c.l.b16 %v469
    %v776 = vunpack.c.h.b16 %v469
    %v777 = vunpack.c.l.b16 %v470
    %v778 = vunpack.c.l.b16 %v471
    %v779 = vunpack.c.h.b16 %v471
    %v780 = vunpack.c.l.b16 %v472
    %v781 = vunpack.c.l.b16 %v473
    %v782 = vunpack.c.h.b16 %v473
    %v783 = vunpack.c.l.b16 %v474
    %v784 = vunpack.c.l.b16 %v475
    %v785 = vunpack.c.h.b16 %v475
    %v786 = vunpack.c.l.b16 %v476
    %v787 = vunpack.c.l.b16 %v477
    %v788 = vunpack.c.h.b16 %v477
    %v789 = vunpack.c.l.b16 %v478
    %v790 = vunpack.c.l.b16 %v479
    %v791 = vunpack.c.h.b16 %v479
    %v792 = vunpack.c.l.b16 %v480
    %v793 = vunpack.c.l.b16 %v481
    %v794 = vunpack.c.h.b16 %v481
    %v795 = vunpack.c.l.b16 %v482
    %v796 = vunpack.c.l.b16 %v483
    %v797 = vunpack.c.h.b16 %v483
    %v798 = vunpack.c.l.b16 %v484
    %v799 = vunpack.c.l.b16 %v485
    %v800 = vunpack.c.h.b16 %v485
    %v801 = vunpack.c.l.b16 %v486
    %v802 = vunpack.c.l.b16 %v487
    %v803 = vunpack.c.h.b16 %v487
    %v804 = vunpack.c.l.b16 %v488
    %v805 = vunpack.c.l.b16 %v489
    %v806 = vunpack.c.h.b16 %v489
    %v807 = vunpack.c.l.b16 %v490
    %v808 = vunpack.c.l.b16 %v491
    %v809 = vunpack.c.h.b16 %v491
    %v810 = vunpack.c.l.b16 %v492
    %v811 = vunpack.c.l.b16 %v493
    %v812 = vunpack.c.h.b16 %v493
    %v813 = vunpack.c.l.b16 %v494
    %v814 = vunpack.c.l.b16 %v495
    %v815 = vunpack.c.h.b16 %v495
    %v816 = vunpack.c.l.b16 %v496
    %v817 = vunpack.c.l.b16 %v497
    %v818 = vunpack.c.h.b16 %v497
    %v819 = vunpack.c.l.b16 %v498
    %v820 = vunpack.c.l.b16 %v499
    %v821 = vunpack.c.h.b16 %v499
    %v822 = vunpack.c.l.b16 %v500
    %v823 = vunpack.c.l.b16 %v501
    %v824 = vunpack.c.h.b16 %v501
    %v825 = vunpack.c.l.b16 %v502
    %v826 = vunpack.c.l.b16 %v503
    %v827 = vunpack.c.h.b16 %v503
    %v828 = vunpack.c.l.b16 %v504
    %v829 = vunpack.c.l.b16 %v505
    %v830 = vunpack.c.h.b16 %v505
    %v831 = vunpack.c.l.b16 %v506
    %v832 = vunpack.c.l.b16 %v507
    %v833 = vunpack.c.h.b16 %v507
    %v834 = vunpack.c.l.b16 %v508
    %v835 = vunpack.c.l.b16 %v509
    %v836 = vunpack.c.h.b16 %v509
    %v837 = vunpack.c.l.b16 %v510
    %v838 = vunpack.c.l.b16 %v511
    %v839 = vunpack.c.h.b16 %v511
    %v840 = vunpack.c.l.b16 %v512
    %v841 = vunpack.c.l.b16 %v513
    %v842 = vunpack.c.h.b16 %v513
    %v843 = vunpack.c.l.b16 %v514
    %v844 = vunpack.c.l.b16 %v515
    %v845 = vunpack.c.h.b16 %v515
    %v846 = vunpack.c.l.b16 %v516
    %v847 = vunpack.c.l.b16 %v517
    %v848 = vunpack.c.h.b16 %v517
    %v849 = vunpack.c.l.b16 %v518
    %v850 = vunpack.c.l.b16 %v519
    %v851 = vunpack.c.h.b16 %v519
    %v852 = vunpack.c.l.b16 %v520
    %v853 = vunpack.c.l.b16 %v521
    %v854 = vunpack.c.h.b16 %v521
    %v855 = vunpack.c.l.b16 %v522
    %v856 = vunpack.c.l.b16 %v523
    %v857 = vunpack.c.h.b16 %v523
    %v858 = vunpack.c.l.b16 %v524
    %v859 = vunpack.c.l.b16 %v525
    %v860 = vunpack.c.h.b16 %v525
    %v861 = vunpack.c.l.b16 %v526
    %v862 = vunpack.c.l.b16 %v527
    %v863 = vunpack.c.h.b16 %v527
    %v864 = vunpack.c.l.b16 %v528
    %v865 = vunpack.c.l.b16 %v529
    %v866 = vunpack.c.h.b16 %v529
    %v867 = vunpack.c.l.b16 %v530
    %v868 = vpack.c.b16 %v679, %v676
    %v869 = vpack.c.b16 %v680, %v677
    %v870 = vpack.c.b16 %v681, %v678
    %v871 = vpack.c.b16 %v685, %v682
    %v872 = vpack.c.b16 %v686, %v683
    %v873 = vpack.c.b16 %v687, %v684
    %v874 = vpack.c.b16 %v691, %v688
    %v875 = vpack.c.b16 %v692, %v689
    %v876 = vpack.c.b16 %v693, %v690
    %v877 = vpack.c.b16 %v697, %v694
    %v878 = vpack.c.b16 %v698, %v695
    %v879 = vpack.c.b16 %v699, %v696
    %v880 = vpack.c.b16 %v703, %v700
    %v881 = vpack.c.b16 %v704, %v701
    %v882 = vpack.c.b16 %v705, %v702
    %v883 = vpack.c.b16 %v709, %v706
    %v884 = vpack.c.b16 %v710, %v707
    %v885 = vpack.c.b16 %v711, %v708
    %v886 = vpack.c.b16 %v715, %v712
    %v887 = vpack.c.b16 %v716, %v713
    %v888 = vpack.c.b16 %v717, %v714
    %v889 = vpack.c.b16 %v721, %v718
    %v890 = vpack.c.b16 %v722, %v719
    %v891 = vpack.c.b16 %v723, %v720
    %v892 = vpack.c.b16 %v727, %v724
    %v893 = vpack.c.b16 %v728, %v725
    %v894 = vpack.c.b16 %v729, %v726
    %v895 = vpack.c.b16 %v733, %v730
    %v896 = vpack.c.b16 %v734, %v731
    %v897 = vpack.c.b16 %v735, %v732
    %v898 = vpack.c.b16 %v739, %v736
    %v899 = vpack.c.b16 %v740, %v737
    %v900 = vpack.c.b16 %v741, %v738
    %v901 = vpack.c.b16 %v745, %v742
    %v902 = vpack.c.b16 %v746, %v743
    %v903 = vpack.c.b16 %v747, %v744
    %v904 = vpack.c.b16 %v751, %v748
    %v905 = vpack.c.b16 %v752, %v749
    %v906 = vpack.c.b16 %v753, %v750
    %v907 = vpack.c.b16 %v757, %v754
    %v908 = vpack.c.b16 %v758, %v755
    %v909 = vpack.c.b16 %v759, %v756
    %v910 = vpack.c.b16 %v763, %v760
    %v911 = vpack.c.b16 %v764, %v761
    %v912 = vpack.c.b16 %v765, %v762
    %v913 = vpack.c.b16 %v769, %v766
    %v914 = vpack.c.b16 %v770, %v767
    %v915 = vpack.c.b16 %v771, %v768
    %v916 = vpack.c.b16 %v775, %v772
    %v917 = vpack.c.b16 %v776, %v773
    %v918 = vpack.c.b16 %v777, %v774
    %v919 = vpack.c.b16 %v781, %v778
    %v920 = vpack.c.b16 %v782, %v779
    %v921 = vpack.c.b16 %v783, %v780
    %v922 = vpack.c.b16 %v787, %v784
    %v923 = vpack.c.b16 %v788, %v785
    %v924 = vpack.c.b16 %v789, %v786
    %v925 = vpack.c.b16 %v793, %v790
    %v926 = vpack.c.b16 %v794, %v791
    %v927 = vpack.c.b16 %v795, %v792
    %v928 = vpack.c.b16 %v799, %v796
    %v929 = vpack.c.b16 %v800, %v797
    %v930 = vpack.c.b16 %v801, %v798
    %v931 = vpack.c.b16 %v805, %v802
    %v932 = vpack.c.b16 %v806, %v803
    %v933 = vpack.c.b16 %v807, %v804
    %v934 = vpack.c.b16 %v811, %v808
    %v935 = vpack.c.b16 %v812, %v809
    %v936 = vpack.c.b16 %v813, %v810
    %v937 = vpack.c.b16 %v817, %v814
    %v938 = vpack.c.b16 %v818, %v815
    %v939 = vpack.c.b16 %v819, %v816
    %v940 = vpack.c.b16 %v823, %v820
    %v941 = vpack.c.b16 %v824, %v821
    %v942 = vpack.c.b16 %v825, %v822
    %v943 = vpack.c.b16 %v829, %v826
    %v944 = vpack.c.b16 %v830, %v827
    %v945 = vpack.c.b16 %v831, %v828
    %v946 = vpack.c.b16 %v835, %v832
    %v947 = vpack.c.b16 %v836, %v833
    %v948 = vpack.c.b16 %v837, %v834
    %v949 = vpack.c.b16 %v841, %v838
    %v950 = vpack.c.b16 %v842, %v839
    %v951 = vpack.c.b16 %v843, %v840
    %v952 = vpack.c.b16 %v847, %v844
    %v953 = vpack.c.b16 %v848, %v845
    %v954 = vpack.c.b16 %v849, %v846
    %v955 = vpack.c.b16 %v853, %v850
    %v956 = vpack.c.b16 %v854, %v851
    %v957 = vpack.c.b16 %v855, %v852
    %v958 = vpack.c.b16 %v859, %v856
    %v959 = vpack.c.b16 %v860, %v857
    %v960 = vpack.c.b16 %v861, %v858
    %v961 = vpack.c.b16 %v865, %v862
    %v962 = vpack.c.b16 %v866, %v863
    %v963 = vpack.c.b16 %v867, %v864
    %1060 = vmatprep.subr.bf16.mxu0 %v869
    %1061 = vmatpush1.bf16.msra.mxu0 %v868
    %1062 = vmatprep.subr.bf16.mxu0 %v872
    %1063 = vmatpush1.bf16.msra.mxu0 %v871
    %1064 = vmatprep.subr.bf16.mxu0 %v875
    %1065 = vmatpush1.bf16.msra.mxu0 %v874
    %1066 = vmatprep.subr.bf16.mxu0 %v878
    %1067 = vmatpush1.bf16.msra.mxu0 %v877
    %1068 = vmatprep.subr.bf16.mxu0 %v881
    %1069 = vmatpush1.bf16.msra.mxu0 %v880
    %1070 = vmatprep.subr.bf16.mxu0 %v884
    %1071 = vmatpush1.bf16.msra.mxu0 %v883
    %1072 = vmatprep.subr.bf16.mxu0 %v887
    %1073 = vmatpush1.bf16.msra.mxu0 %v886
    %1074 = vmatprep.subr.bf16.mxu0 %v890
    %1075 = vmatpush1.bf16.msra.mxu0 %v889
    %1076 = vmatprep.subr.bf16.mxu0 %v893
    %1077 = vmatpush1.bf16.msra.mxu0 %v892
    %1078 = vmatprep.subr.bf16.mxu0 %v896
    %1079 = vmatpush1.bf16.msra.mxu0 %v895
    %1080 = vmatprep.subr.bf16.mxu0 %v899
    %1081 = vmatpush1.bf16.msra.mxu0 %v898
    %1082 = vmatprep.subr.bf16.mxu0 %v902
    %1083 = vmatpush1.bf16.msra.mxu0 %v901
    %1084 = vmatprep.subr.bf16.mxu0 %v905
    %1085 = vmatpush1.bf16.msra.mxu0 %v904
    %1086 = vmatprep.subr.bf16.mxu0 %v908
    %1087 = vmatpush1.bf16.msra.mxu0 %v907
    %1088 = vmatprep.subr.bf16.mxu0 %v911
    %1089 = vmatpush1.bf16.msra.mxu0 %v910
    %1090 = vmatprep.subr.bf16.mxu0 %v914
    %1091 = vmatpush1.bf16.msra.mxu0 %v913
    %1092 = vmatprep.mubr.bf16.mxu0 %v400
    %1093 = vmatmul.mubr.bf16.gmra.mrb[0].mxu0 %v399
    %v1094 = vpop.f32.mrb[0].mxu0
    %v1095 = vadd.f32 %v536, %v1094
    %v1096 = vpop.f32.mrb[0].mxu0
    %v1097 = vadd.f32 %v540, %v1096
    %v1098 = vpop.f32.mrb[0].mxu0
    %v1099 = vadd.f32 %v536, %v1098
    %v1100 = vpop.f32.mrb[0].mxu0
    %v1101 = vadd.f32 %v540, %v1100
    %1102 = vdwg.mxu0
    %1103 = vmatprep.subr.bf16.mxu0 %v917
    %1104 = vmatpush1.bf16.msra.mxu0 %v916
    %1105 = vmatprep.subr.bf16.mxu0 %v920
    %1106 = vmatpush1.bf16.msra.mxu0 %v919
    %1107 = vmatprep.subr.bf16.mxu0 %v923
    %1108 = vmatpush1.bf16.msra.mxu0 %v922
    %1109 = vmatprep.subr.bf16.mxu0 %v926
    %1110 = vmatpush1.bf16.msra.mxu0 %v925
    %1111 = vmatprep.subr.bf16.mxu0 %v929
    %1112 = vmatpush1.bf16.msra.mxu0 %v928
    %1113 = vmatprep.subr.bf16.mxu0 %v932
    %1114 = vmatpush1.bf16.msra.mxu0 %v931
    %1115 = vmatprep.subr.bf16.mxu0 %v935
    %1116 = vmatpush1.bf16.msra.mxu0 %v934
    %1117 = vmatprep.subr.bf16.mxu0 %v938
    %1118 = vmatpush1.bf16.msra.mxu0 %v937
    %1119 = vmatprep.subr.bf16.mxu0 %v941
    %1120 = vmatpush1.bf16.msra.mxu0 %v940
    %1121 = vmatprep.subr.bf16.mxu0 %v944
    %1122 = vmatpush1.bf16.msra.mxu0 %v943
    %1123 = vmatprep.subr.bf16.mxu0 %v947
    %1124 = vmatpush1.bf16.msra.mxu0 %v946
    %1125 = vmatprep.subr.bf16.mxu0 %v950
    %1126 = vmatpush1.bf16.msra.mxu0 %v949
    %1127 = vmatprep.subr.bf16.mxu0 %v953
    %1128 = vmatpush1.bf16.msra.mxu0 %v952
    %1129 = vmatprep.subr.bf16.mxu0 %v956
    %1130 = vmatpush1.bf16.msra.mxu0 %v955
    %1131 = vmatprep.subr.bf16.mxu0 %v959
    %1132 = vmatpush1.bf16.msra.mxu0 %v958
    %1133 = vmatprep.subr.bf16.mxu0 %v962
    %1134 = vmatpush1.bf16.msra.mxu0 %v961
    %1135 = vmatprep.mubr.bf16.mxu0 %v402
    %1136 = vmatmul.mubr.bf16.gmra.mrb[0].mxu0 %v401
    %v1137 = vpop.f32.mrb[0].mxu0
    %v1138 = vadd.f32 %v1095, %v1137
    %v1139 = vpop.f32.mrb[0].mxu0
    %v1140 = vadd.f32 %v1097, %v1139
    %v1141 = vpop.f32.mrb[0].mxu0
    %v1142 = vadd.f32 %v1099, %v1141
    %v1143 = vpop.f32.mrb[0].mxu0
    %v1144 = vadd.f32 %v1101, %v1143
    %1145 = vdwg.mxu0
    %1146 = vmatprep.subr.bf16.mxu0 0
    %1147 = vmatpush1.bf16.msra.mxu0 %v870
    %1148 = vmatprep.subr.bf16.mxu0 0
    %1149 = vmatpush1.bf16.msra.mxu0 %v873
    %1150 = vmatprep.subr.bf16.mxu0 0
    %1151 = vmatpush1.bf16.msra.mxu0 %v876
    %1152 = vmatprep.subr.bf16.mxu0 0
    %1153 = vmatpush1.bf16.msra.mxu0 %v879
    %1154 = vmatprep.subr.bf16.mxu0 0
    %1155 = vmatpush1.bf16.msra.mxu0 %v882
    %1156 = vmatprep.subr.bf16.mxu0 0
    %1157 = vmatpush1.bf16.msra.mxu0 %v885
    %1158 = vmatprep.subr.bf16.mxu0 0
    %1159 = vmatpush1.bf16.msra.mxu0 %v888
    %1160 = vmatprep.subr.bf16.mxu0 0
    %1161 = vmatpush1.bf16.msra.mxu0 %v891
    %1162 = vmatprep.subr.bf16.mxu0 0
    %1163 = vmatpush1.bf16.msra.mxu0 %v894
    %1164 = vmatprep.subr.bf16.mxu0 0
    %1165 = vmatpush1.bf16.msra.mxu0 %v897
    %1166 = vmatprep.subr.bf16.mxu0 0
    %1167 = vmatpush1.bf16.msra.mxu0 %v900
    %1168 = vmatprep.subr.bf16.mxu0 0
    %1169 = vmatpush1.bf16.msra.mxu0 %v903
    %1170 = vmatprep.subr.bf16.mxu0 0
    %1171 = vmatpush1.bf16.msra.mxu0 %v906
    %1172 = vmatprep.subr.bf16.mxu0 0
    %1173 = vmatpush1.bf16.msra.mxu0 %v909
    %1174 = vmatprep.subr.bf16.mxu0 0
    %1175 = vmatpush1.bf16.msra.mxu0 %v912
    %1176 = vmatprep.subr.bf16.mxu0 0
    %1177 = vmatpush1.bf16.msra.mxu0 %v915
    %1178 = vmatprep.mubr.bf16.mxu0 %v400
    %1179 = vmatmul.mubr.bf16.gmra.mrb[0].mxu0 %v399
    %v1180 = vpop.f32.mrb[0].mxu0
    %v1181 = vadd.f32 %v544, %v1180
    %v1182 = vpop.f32.mrb[0].mxu0
    %v1183 = vpop.f32.mrb[0].mxu0
    %v1184 = vadd.f32 %v544, %v1183
    %v1185 = vpop.f32.mrb[0].mxu0
    %1186 = vdwg.mxu0
    %1187 = vmatprep.subr.bf16.mxu0 0
    %1188 = vmatpush1.bf16.msra.mxu0 %v918
    %1189 = vmatprep.subr.bf16.mxu0 0
    %1190 = vmatpush1.bf16.msra.mxu0 %v921
    %1191 = vmatprep.subr.bf16.mxu0 0
    %1192 = vmatpush1.bf16.msra.mxu0 %v924
    %1193 = vmatprep.subr.bf16.mxu0 0
    %1194 = vmatpush1.bf16.msra.mxu0 %v927
    %1195 = vmatprep.subr.bf16.mxu0 0
    %1196 = vmatpush1.bf16.msra.mxu0 %v930
    %1197 = vmatprep.subr.bf16.mxu0 0
    %1198 = vmatpush1.bf16.msra.mxu0 %v933
    %1199 = vmatprep.subr.bf16.mxu0 0
    %1200 = vmatpush1.bf16.msra.mxu0 %v936
    %1201 = vmatprep.subr.bf16.mxu0 0
    %1202 = vmatpush1.bf16.msra.mxu0 %v939
    %1203 = vmatprep.subr.bf16.mxu0 0
    %1204 = vmatpush1.bf16.msra.mxu0 %v942
    %1205 = vmatprep.subr.bf16.mxu0 0
    %1206 = vmatpush1.bf16.msra.mxu0 %v945
    %1207 = vmatprep.subr.bf16.mxu0 0
    %1208 = vmatpush1.bf16.msra.mxu0 %v948
    %1209 = vmatprep.subr.bf16.mxu0 0
    %1210 = vmatpush1.bf16.msra.mxu0 %v951
    %1211 = vmatprep.subr.bf16.mxu0 0
    %1212 = vmatpush1.bf16.msra.mxu0 %v954
    %1213 = vmatprep.subr.bf16.mxu0 0
    %1214 = vmatpush1.bf16.msra.mxu0 %v957
    %1215 = vmatprep.subr.bf16.mxu0 0
    %1216 = vmatpush1.bf16.msra.mxu0 %v960
    %1217 = vmatprep.subr.bf16.mxu0 0
    %1218 = vmatpush1.bf16.msra.mxu0 %v963
    %1219 = vmatprep.mubr.bf16.mxu0 %v402
    %1220 = vmatmul.mubr.bf16.gmra.mrb[0].mxu0 %v401
    %v1221 = vpop.f32.mrb[0].mxu0
    %v1222 = vadd.f32 %v1181, %v1221
    %v1223 = vpop.f32.mrb[0].mxu0
    %v1224 = vpop.f32.mrb[0].mxu0
    %v1225 = vadd.f32 %v1184, %v1224
    %v1226 = vpop.f32.mrb[0].mxu0
    %1227 = vdwg.mxu0
    %v1228 = vmax.f32 %v1138, 0.0
    %v1229 = vmax.f32 %v1140, 0.0
    %v1230 = vmax.f32 %v1222, 0.0
    %v1231 = vmax.f32 %v1142, 0.0
    %v1232 = vmax.f32 %v1144, 0.0
    %v1233 = vmax.f32 %v1225, 0.0
    %v1234 = vpack.c.bf16 %v1231, %v1228
    %v1235 = vpack.c.bf16 %v1232, %v1229
    %v1236 = vpack.c.bf16 %v1233, %v1230
    %v1237 = vld [vmem:[#allocation8] sm:$0xf]
    %v1238 = vld [vmem:[#allocation8 + $0x4] sm:$0xf]
    %v1239 = vld [vmem:[#allocation8 + $0x8] sm:$0xf]
    %v1240 = vld [vmem:[#allocation8 + $0xc] sm:$0xf]
    %v1241 = vld [vmem:[#allocation8 + $0x10] sm:$0xf]
    %v1242 = vld [vmem:[#allocation8 + $0x14] sm:$0xf]
    %v1243 = vld [vmem:[#allocation8 + $0x18] sm:$0xf]
    %v1244 = vld [vmem:[#allocation8 + $0x1c] sm:$0xf]
    %v1245 = vld [vmem:[#allocation8 + $0x20] sm:$0xf]
    %v1246 = vld [vmem:[#allocation8 + $0x24] sm:$0xf]
    %v1247 = vld [vmem:[#allocation8 + $0x28] sm:$0xf]
    %v1248 = vld [vmem:[#allocation8 + $0x2c] sm:$0xf]
    %v1249 = vld [vmem:[#allocation8 + $0x30] sm:$0xf]
    %v1250 = vld [vmem:[#allocation8 + $0x34] sm:$0xf]
    %v1251 = vld [vmem:[#allocation8 + $0x38] sm:$0xf]
    %v1252 = vld [vmem:[#allocation8 + $0x3c] sm:$0xf]
    %v1253 = vld [vmem:[#allocation8 + $0x40] sm:$0xf]
    %v1254 = vld [vmem:[#allocation8 + $0x44] sm:$0xf]
    %v1255 = vld [vmem:[#allocation8 + $0x48] sm:$0xf]
    %v1256 = vld [vmem:[#allocation8 + $0x4c] sm:$0xf]
    %v1257 = vld [vmem:[#allocation8 + $0x50] sm:$0xf]
    %v1258 = vld [vmem:[#allocation8 + $0x54] sm:$0xf]
    %v1259 = vld [vmem:[#allocation8 + $0x58] sm:$0xf]
    %v1260 = vld [vmem:[#allocation8 + $0x5c] sm:$0xf]
    %v1261 = vld [vmem:[#allocation8 + $0x60] sm:$0xf]
    %v1262 = vld [vmem:[#allocation8 + $0x64] sm:$0xf]
    %v1263 = vld [vmem:[#allocation8 + $0x68] sm:$0xf]
    %v1264 = vld [vmem:[#allocation8 + $0x6c] sm:$0xf]
    %v1265 = vld [vmem:[#allocation8 + $0x70] sm:$0xf]
    %v1266 = vld [vmem:[#allocation8 + $0x74] sm:$0xf]
    %v1267 = vld [vmem:[#allocation8 + $0x78] sm:$0xf]
    %v1268 = vld [vmem:[#allocation8 + $0x7c] sm:$0xf]
    %v1269 = vld [vmem:[#allocation8 + $0x80] sm:$0xf]
    %v1270 = vld [vmem:[#allocation8 + $0x84] sm:$0xf]
    %v1271 = vld [vmem:[#allocation8 + $0x88] sm:$0xf]
    %v1272 = vld [vmem:[#allocation8 + $0x8c] sm:$0xf]
    %v1273 = vld [vmem:[#allocation8 + $0x90] sm:$0xf]
    %v1274 = vld [vmem:[#allocation8 + $0x94] sm:$0xf]
    %v1275 = vld [vmem:[#allocation8 + $0x98] sm:$0xf]
    %v1276 = vld [vmem:[#allocation8 + $0x9c] sm:$0xf]
    %v1277 = vld [vmem:[#allocation8 + $0xa0] sm:$0xf]
    %v1278 = vld [vmem:[#allocation8 + $0xa4] sm:$0xf]
    %v1279 = vld [vmem:[#allocation8 + $0xa8] sm:$0xf]
    %v1280 = vld [vmem:[#allocation8 + $0xac] sm:$0xf]
    %v1281 = vld [vmem:[#allocation8 + $0xb0] sm:$0xf]
    %v1282 = vld [vmem:[#allocation8 + $0xb4] sm:$0xf]
    %v1283 = vld [vmem:[#allocation8 + $0xb8] sm:$0xf]
    %v1284 = vld [vmem:[#allocation8 + $0xbc] sm:$0xf]
    %v1285 = vld [vmem:[%s6] sm:$0x1]
    %v1287 = vlaneseq
    %v1288 = vshrl.u32 %v1287, 7
    %v1289 = vsub.s32 0, %v1288
    %v1290 = vrot.slane %v1285, %v1289
    %v1340 = vunpack.c.l.b16 %v1237
    %v1341 = vunpack.c.l.b16 %v1238
    %v1342 = vunpack.c.l.b16 %v1239
    %v1343 = vunpack.c.l.b16 %v1240
    %v1344 = vunpack.c.l.b16 %v1241
    %v1345 = vunpack.c.l.b16 %v1242
    %v1346 = vunpack.c.l.b16 %v1243
    %v1347 = vunpack.c.l.b16 %v1244
    %v1348 = vunpack.c.l.b16 %v1245
    %v1349 = vunpack.c.l.b16 %v1246
    %v1350 = vunpack.c.l.b16 %v1247
    %v1351 = vunpack.c.l.b16 %v1248
    %v1352 = vunpack.c.l.b16 %v1249
    %v1353 = vunpack.c.l.b16 %v1250
    %v1354 = vunpack.c.l.b16 %v1251
    %v1355 = vunpack.c.l.b16 %v1252
    %v1356 = vunpack.c.l.b16 %v1253
    %v1357 = vunpack.c.l.b16 %v1254
    %v1358 = vunpack.c.l.b16 %v1255
    %v1359 = vunpack.c.l.b16 %v1256
    %v1360 = vunpack.c.l.b16 %v1257
    %v1361 = vunpack.c.l.b16 %v1258
    %v1362 = vunpack.c.l.b16 %v1259
    %v1363 = vunpack.c.l.b16 %v1260
    %v1364 = vunpack.c.l.b16 %v1261
    %v1365 = vunpack.c.l.b16 %v1262
    %v1366 = vunpack.c.l.b16 %v1263
    %v1367 = vunpack.c.l.b16 %v1264
    %v1368 = vunpack.c.l.b16 %v1265
    %v1369 = vunpack.c.l.b16 %v1266
    %v1370 = vunpack.c.l.b16 %v1267
    %v1371 = vunpack.c.l.b16 %v1268
    %v1372 = vunpack.c.l.b16 %v1269
    %v1373 = vunpack.c.l.b16 %v1270
    %v1374 = vunpack.c.l.b16 %v1271
    %v1375 = vunpack.c.l.b16 %v1272
    %v1376 = vunpack.c.l.b16 %v1273
    %v1377 = vunpack.c.l.b16 %v1274
    %v1378 = vunpack.c.l.b16 %v1275
    %v1379 = vunpack.c.l.b16 %v1276
    %v1380 = vunpack.c.l.b16 %v1277
    %v1381 = vunpack.c.l.b16 %v1278
    %v1382 = vunpack.c.l.b16 %v1279
    %v1383 = vunpack.c.l.b16 %v1280
    %v1384 = vunpack.c.l.b16 %v1281
    %v1385 = vunpack.c.l.b16 %v1282
    %v1386 = vunpack.c.l.b16 %v1283
    %v1387 = vunpack.c.l.b16 %v1284
    %v1388 = vpack.c.b16 %v1341, %v1340
    %v1389 = vpack.c.b16 %v1343, %v1342
    %v1390 = vpack.c.b16 %v1345, %v1344
    %v1391 = vpack.c.b16 %v1347, %v1346
    %v1392 = vpack.c.b16 %v1349, %v1348
    %v1393 = vpack.c.b16 %v1351, %v1350
    %v1394 = vpack.c.b16 %v1353, %v1352
    %v1395 = vpack.c.b16 %v1355, %v1354
    %v1396 = vpack.c.b16 %v1357, %v1356
    %v1397 = vpack.c.b16 %v1359, %v1358
    %v1398 = vpack.c.b16 %v1361, %v1360
    %v1399 = vpack.c.b16 %v1363, %v1362
    %v1400 = vpack.c.b16 %v1365, %v1364
    %v1401 = vpack.c.b16 %v1367, %v1366
    %v1402 = vpack.c.b16 %v1369, %v1368
    %v1403 = vpack.c.b16 %v1371, %v1370
    %v1404 = vpack.c.b16 %v1373, %v1372
    %v1405 = vpack.c.b16 %v1375, %v1374
    %v1406 = vpack.c.b16 %v1377, %v1376
    %v1407 = vpack.c.b16 %v1379, %v1378
    %v1408 = vpack.c.b16 %v1381, %v1380
    %v1409 = vpack.c.b16 %v1383, %v1382
    %v1410 = vpack.c.b16 %v1385, %v1384
    %v1411 = vpack.c.b16 %v1387, %v1386
    %1436 = vmatprep.subr.bf16.mxu0 0
    %1437 = vmatpush1.bf16.msra.mxu0 %v1388
    %1438 = vmatprep.subr.bf16.mxu0 0
    %1439 = vmatpush1.bf16.msra.mxu0 %v1389
    %1440 = vmatprep.subr.bf16.mxu0 0
    %1441 = vmatpush1.bf16.msra.mxu0 %v1390
    %1442 = vmatprep.subr.bf16.mxu0 0
    %1443 = vmatpush1.bf16.msra.mxu0 %v1391
    %1444 = vmatprep.subr.bf16.mxu0 0
    %1445 = vmatpush1.bf16.msra.mxu0 %v1392
    %1446 = vmatprep.subr.bf16.mxu0 0
    %1447 = vmatpush1.bf16.msra.mxu0 %v1393
    %1448 = vmatprep.subr.bf16.mxu0 0
    %1449 = vmatpush1.bf16.msra.mxu0 %v1394
    %1450 = vmatprep.subr.bf16.mxu0 0
    %1451 = vmatpush1.bf16.msra.mxu0 %v1395
    %1452 = vmatprep.subr.bf16.mxu0 0
    %1453 = vmatpush1.bf16.msra.mxu0 %v1396
    %1454 = vmatprep.subr.bf16.mxu0 0
    %1455 = vmatpush1.bf16.msra.mxu0 %v1397
    %1456 = vmatprep.subr.bf16.mxu0 0
    %1457 = vmatpush1.bf16.msra.mxu0 %v1398
    %1458 = vmatprep.subr.bf16.mxu0 0
    %1459 = vmatpush1.bf16.msra.mxu0 %v1399
    %1460 = vmatprep.subr.bf16.mxu0 0
    %1461 = vmatpush1.bf16.msra.mxu0 %v1400
    %1462 = vmatprep.subr.bf16.mxu0 0
    %1463 = vmatpush1.bf16.msra.mxu0 %v1401
    %1464 = vmatprep.subr.bf16.mxu0 0
    %1465 = vmatpush1.bf16.msra.mxu0 %v1402
    %1466 = vmatprep.subr.bf16.mxu0 0
    %1467 = vmatpush1.bf16.msra.mxu0 %v1403
    %1468 = vmatprep.mubr.bf16.mxu0 %v1235
    %1469 = vmatmul.mubr.bf16.gmra.mrb[0].mxu0 %v1234
    %v1470 = vpop.f32.mrb[0].mxu0
    %v1471 = vadd.f32 %v1290, %v1470
    %v1472 = vpop.f32.mrb[0].mxu0
    %v1473 = vpop.f32.mrb[0].mxu0
    %v1474 = vadd.f32 %v1290, %v1473
    %v1475 = vpop.f32.mrb[0].mxu0
    %1476 = vdwg.mxu0
    %1477 = vmatprep.subr.bf16.mxu0 0
    %1478 = vmatpush1.bf16.msra.mxu0 %v1404
    %1479 = vmatprep.subr.bf16.mxu0 0
    %1480 = vmatpush1.bf16.msra.mxu0 %v1405
    %1481 = vmatprep.subr.bf16.mxu0 0
    %1482 = vmatpush1.bf16.msra.mxu0 %v1406
    %1483 = vmatprep.subr.bf16.mxu0 0
    %1484 = vmatpush1.bf16.msra.mxu0 %v1407
    %1485 = vmatprep.subr.bf16.mxu0 0
    %1486 = vmatpush1.bf16.msra.mxu0 %v1408
    %1487 = vmatprep.subr.bf16.mxu0 0
    %1488 = vmatpush1.bf16.msra.mxu0 %v1409
    %1489 = vmatprep.subr.bf16.mxu0 0
    %1490 = vmatpush1.bf16.msra.mxu0 %v1410
    %1491 = vmatprep.subr.bf16.mxu0 0
    %1492 = vmatpush1.bf16.msra.mxu0 %v1411
    %1493 = vmatprep.subr.bf16.mxu0 0
    %1494 = vmatpush1.bf16.msra.mxu0 0
    %1495 = vmatprep.subr.bf16.mxu0 0
    %1496 = vmatpush1.bf16.msra.mxu0 0
    %1497 = vmatprep.subr.bf16.mxu0 0
    %1498 = vmatpush1.bf16.msra.mxu0 0
    %1499 = vmatprep.subr.bf16.mxu0 0
    %1500 = vmatpush1.bf16.msra.mxu0 0
    %1501 = vmatprep.subr.bf16.mxu0 0
    %1502 = vmatpush1.bf16.msra.mxu0 0
    %1503 = vmatprep.subr.bf16.mxu0 0
    %1504 = vmatpush1.bf16.msra.mxu0 0
    %1505 = vmatprep.subr.bf16.mxu0 0
    %1506 = vmatpush1.bf16.msra.mxu0 0
    %1507 = vmatprep.subr.bf16.mxu0 0
    %1508 = vmatpush1.bf16.msra.mxu0 0
    %1509 = vmatprep.mubr.bf16.mxu0 0
    %1510 = vmatmul.mubr.bf16.gmra.mrb[0].mxu0 %v1236
    %v1511 = vpop.f32.mrb[0].mxu0
    %v1512 = vadd.f32 %v1471, %v1511
    %v1513 = vpop.f32.mrb[0].mxu0
    %v1514 = vpop.f32.mrb[0].mxu0
    %v1515 = vadd.f32 %v1474, %v1514
    %v1516 = vpop.f32.mrb[0].mxu0
    %1517 = vdwg.mxu0
    %v1518 = vtanh.pop %v1512
    %v1519 = vtanh.pop %v1515
    %1520 = vst [vmem:[#allocation10] sm:$0xff] %v1518
    %1521 = vst [vmem:[#allocation10 + $0x8] sm:$0xff] %v1519
    // Predicated region
    $region46: #{tpu_custom_call.1} parent=1 // pred_check
      _
    $region47: #{tpu_custom_call.1} parent=1 // pred_check_branch
      %1523 = sbr.rel (0) target = $region49
    $region48: #{tpu_custom_call.1} parent=1 // pred_region
      %s1525 = ssub.s32 256, 256
      %1526 = vsyncadd [#allocation4], %s1525
      %s1527 = sshll.u32 [#allocation10], 4
      %s1528 = int_to_ptr.vmem [resolvable:$true] %s1527
      %1533 = dma.vmem_to_hbm [thread:$0]  %s1528, 256, %s7, [#allocation4], 128, 128, 8
    $region49: #{tpu_custom_call.1} parent=1 // pred_fallthru
      _
    // Predicated region
    $region50: #{tpu_custom_call.1} parent=1 // pred_check
      _
    $region51: #{tpu_custom_call.1} parent=1 // pred_check_branch
      %1535 = sbr.rel (0) target = $region53
    $region52: #{tpu_custom_call.1} parent=1 // pred_region
      %1536 = dma.done [#allocation4], 256
    $region53: #{tpu_custom_call.1} parent=1 // pred_fallthru
      _
    %1537 = vsyncpa [#allocation3], 1
    %1538 = vsyncpa [#allocation6], 1
    %1539 = vsyncpa [#allocation9], 1
    %1540 = vsyncpa [#allocation4], 1

</llo_original>
